<compile_context>
chip_gen: v5e
topology: v5e:2x2
jax: 0.10.0
libtpu: 0.0.40
codegen_flags: <defaults>
</compile_context>

<pallas_src>
import functools

import jax
import jax.numpy as jnp
from jax.experimental import pallas as pl
from jax.experimental.pallas import tpu as pltpu

BN_EPS = 1e-5


# ----------------------------------------------------------------------------
# Fused kernel (built per-architecture; layer count is static at trace time)
# ----------------------------------------------------------------------------
def _make_fused_mlp_kernel(n_layers, bf16_matmul):
    """Kernel ref layout:
       refs = (x, [w, b, gamma, beta] * (n_layers-1), w_last, b_last, out)."""

    def kernel(*refs):
        x_ref = refs[0]
        out_ref = refs[-1]
        idx = 1
        x = x_ref[...].astype(jnp.float32)

        for i in range(n_layers):
            last = i == n_layers - 1
            if last:
                w_ref, b_ref = refs[idx], refs[idx + 1]
                idx += 2
            else:
                w_ref, b_ref, g_ref, be_ref = refs[idx:idx + 4]
                idx += 4

            if bf16_matmul:
                lhs = x.astype(jnp.bfloat16)
                rhs = w_ref[...].astype(jnp.bfloat16)
            else:
                lhs = x
                rhs = w_ref[...]
            # MXU matmul, always accumulated in f32.
            h = jnp.dot(lhs, rhs, preferred_element_type=jnp.float32)
            h = h + b_ref[...]                                  # (B, out) + (1, out)

            if last:
                x = jnp.tanh(h)
            else:
                # One-pass BN stats: var = E[h^2] - E[h]^2 (biased, training mode).
                mean = jnp.mean(h, axis=0, keepdims=True)
                mean_sq = jnp.mean(h * h, axis=0, keepdims=True)
                var = jnp.maximum(mean_sq - mean * mean, 0.0)
                h = (h - mean) * jax.lax.rsqrt(var + BN_EPS)
                h = h * g_ref[...] + be_ref[...]
                x = jnp.maximum(h, 0.0)                          # ReLU

        out_ref[...] = x.astype(out_ref.dtype)

    return kernel


def _flatten_params(params):
    n_layers = len(params)
    flat = []
    for i, layer in enumerate(params):
        flat.append(layer["w"])
        flat.append(layer["b"])
        if i != n_layers - 1:
            flat.append(layer["gamma"])
            flat.append(layer["beta"])
    return flat


def fused_mlp(x, params, bf16_matmul=False):
    """x: (B, latent) f32 -> (B, arch[-1]) f32, all layers in one pallas_call."""
    n_layers = len(params)
    batch = x.shape[0]
    out_dim = params[-1]["w"].shape[1]
    flat = [x] + _flatten_params(params)

    vmem = pl.BlockSpec(memory_space=pltpu.MemorySpace.VMEM)
    return pl.pallas_call(
        _make_fused_mlp_kernel(n_layers, bf16_matmul),
        out_shape=jax.ShapeDtypeStruct((batch, out_dim), jnp.float32),
        in_specs=[vmem] * len(flat),
        out_specs=vmem,
    )(*flat)


# ----------------------------------------------------------------------------
# Parameter init (deterministic, PyTorch-Linear-like uniform init)
# ----------------------------------------------------------------------------
def init_params(arch, key):
    params = []
    n_layers = len(arch) - 1
    for i in range(n_layers):
        fan_in, fan_out = arch[i], arch[i + 1]
        key, kw, kb, kg, kbe = jax.random.split(key, 5)
        bound = 1.0 / (fan_in ** 0.5)
        w = jax.random.uniform(kw, (fan_in, fan_out), jnp.float32, -bound, bound)
        b = jax.random.uniform(kb, (1, fan_out), jnp.float32, -bound, bound)
        layer = {"w": w, "b": b}
        if i != n_layers - 1:
            # BatchNorm1d affine params (default init ones/zeros; perturbed
            # slightly so the kernel path is non-trivial but deterministic).
            layer["gamma"] = 1.0 + 0.1 * jax.random.normal(kg, (1, fan_out), jnp.float32)
            layer["beta"] = 0.1 * jax.random.normal(kbe, (1, fan_out), jnp.float32)
        params.append(layer)
    return params


# ----------------------------------------------------------------------------
# Forward (wrapper = reshape glue only; hot path is the single fused kernel)
# ----------------------------------------------------------------------------
@functools.partial(jax.jit, static_argnames=("bf16_matmul",))
def mlp_generator_forward(z, params, bf16_matmul=False):
    # z.view(*z.shape[:2]) : (B, latent, 1, 1) -> (B, latent)
    b = z.shape[0]
    x = z.reshape(b, z.shape[1]).astype(jnp.float32)
    out = fused_mlp(x, params, bf16_matmul=bf16_matmul)
    # .view(B, 1, 32, 32) -- requires arch[-1] == 1024
    return out.reshape(b, 1, 32, 32)


# ----------------------------------------------------------------------------
# Pure-JAX reference for a sanity check
# ----------------------------------------------------------------------------
def reference_forward(z, params, bf16_matmul=False):
    b = z.shape[0]
    x = z.reshape(b, z.shape[1]).astype(jnp.float32)
    n_layers = len(params)
    for i, layer in enumerate(params):
        if bf16_matmul:
            h = jnp.dot(x.astype(jnp.bfloat16), layer["w"].astype(jnp.bfloat16),
                        preferred_element_type=jnp.float32)
        else:
            h = jnp.dot(x, layer["w"], preferred_element_type=jnp.float32)
        h = h + layer["b"]
        if i != n_layers - 1:
            mean = jnp.mean(h, axis=0, keepdims=True)
            var = jnp.mean((h - mean) ** 2, axis=0, keepdims=True)
            h = (h - mean) / jnp.sqrt(var + BN_EPS)
            h = h * layer["gamma"] + layer["beta"]
            x = jnp.maximum(h, 0.0)
        else:
            x = jnp.tanh(h)
    return x.reshape(b, 1, 32, 32)


if __name__ == "__main__":
    # arch: latent 64 -> hidden 256 -> 1024 (output must be 1024 = 1*32*32)
    arch = [64, 256, 1024]
    batch = 8  # small; note MXU is latency-bound at this M — batch up for throughput

    key = jax.random.PRNGKey(0)
    key, kz = jax.random.split(key)
    params = init_params(arch, key)

    # GAN latent z: (B, latent_dim, 1, 1), squeezed by forward's view.
    z = jax.random.normal(kz, (batch, arch[0], 1, 1), dtype=jnp.float32)

    # --- f32 MXU operand path (default; exact vs f32 reference) ---
    out = mlp_generator_forward(z, params)
    out = jax.block_until_ready(out)
    assert out.shape == (batch, 1, 32, 32), out.shape
    ref = reference_forward(z, params)
    assert jnp.allclose(out, ref, atol=1e-5, rtol=1e-5), \
        float(jnp.max(jnp.abs(out - ref)))

    # --- bf16 MXU operand path (v6e/v7x bandwidth/MXU optimization) ---
    out_bf16 = mlp_generator_forward(z, params, bf16_matmul=True)
    out_bf16 = jax.block_until_ready(out_bf16)
    ref_bf16 = reference_forward(z, params, bf16_matmul=True)
    assert jnp.allclose(out_bf16, ref_bf16, atol=1e-3, rtol=1e-3), \
        float(jnp.max(jnp.abs(out_bf16 - ref_bf16)))

    print("KERNEL_OK")
</pallas_src>

<mosaic_0001>
module attributes {stable_mosaic.version = 11 : i64} {
  func.func @kernel(%arg0: memref<8x64xf32, #tpu.memory_space<vmem>>, %arg1: memref<64x256xf32, #tpu.memory_space<vmem>>, %arg2: memref<1x256xf32, #tpu.memory_space<vmem>>, %arg3: memref<1x256xf32, #tpu.memory_space<vmem>>, %arg4: memref<1x256xf32, #tpu.memory_space<vmem>>, %arg5: memref<256x1024xf32, #tpu.memory_space<vmem>>, %arg6: memref<1x1024xf32, #tpu.memory_space<vmem>>, %arg7: memref<8x1024xf32, #tpu.memory_space<vmem>>) attributes {dimension_semantics = [], scalar_prefetch = 0 : i64, scratch_operands = 0 : i64, tpu.core_type = #tpu.core_type<tc>} {
    %c0 = arith.constant 0 : index
    %c0_0 = arith.constant 0 : index
    %0 = vector.load %arg0[%c0, %c0_0] : memref<8x64xf32, #tpu.memory_space<vmem>>, vector<8x64xf32>
    %c0_1 = arith.constant 0 : index
    %c0_2 = arith.constant 0 : index
    %1 = vector.load %arg1[%c0_1, %c0_2] : memref<64x256xf32, #tpu.memory_space<vmem>>, vector<64x256xf32>
    %cst = arith.constant dense<0.000000e+00> : vector<8x256xf32>
    %2 = tpu.matmul %0, %1, %cst {dimension_numbers = #tpu.dot_dimension_numbers<[1], [0], [0], [1], [0, 0, 1, 1], [], []>} : vector<8x64xf32>, vector<64x256xf32>, vector<8x256xf32> -> vector<8x256xf32>
    %c0_3 = arith.constant 0 : index
    %c0_4 = arith.constant 0 : index
    %3 = vector.load %arg2[%c0_3, %c0_4] : memref<1x256xf32, #tpu.memory_space<vmem>>, vector<1x256xf32>
    %4 = vector.broadcast %3 : vector<1x256xf32> to vector<8x256xf32>
    %5 = arith.addf %2, %4 : vector<8x256xf32>
    %cst_5 = arith.constant dense<0.000000e+00> : vector<256xf32>
    %6 = vector.multi_reduction <add>, %5, %cst_5 [0] : vector<8x256xf32> to vector<256xf32>
    %7 = vector.shape_cast %6 : vector<256xf32> to vector<1x256xf32>
    %cst_6 = arith.constant 8.000000e+00 : f32
    %8 = vector.broadcast %cst_6 : f32 to vector<1x256xf32>
    %9 = arith.divf %7, %8 : vector<1x256xf32>
    %10 = arith.mulf %5, %5 : vector<8x256xf32>
    %cst_7 = arith.constant dense<0.000000e+00> : vector<256xf32>
    %11 = vector.multi_reduction <add>, %10, %cst_7 [0] : vector<8x256xf32> to vector<256xf32>
    %12 = vector.shape_cast %11 : vector<256xf32> to vector<1x256xf32>
    %cst_8 = arith.constant 8.000000e+00 : f32
    %13 = vector.broadcast %cst_8 : f32 to vector<1x256xf32>
    %14 = arith.divf %12, %13 : vector<1x256xf32>
    %15 = arith.mulf %9, %9 : vector<1x256xf32>
    %16 = arith.subf %14, %15 : vector<1x256xf32>
    %cst_9 = arith.constant 0.000000e+00 : f32
    %17 = vector.broadcast %cst_9 : f32 to vector<1x256xf32>
    %18 = arith.maximumf %16, %17 : vector<1x256xf32>
    %19 = vector.broadcast %9 : vector<1x256xf32> to vector<8x256xf32>
    %20 = arith.subf %5, %19 : vector<8x256xf32>
    %cst_10 = arith.constant 9.99999974E-6 : f32
    %21 = vector.broadcast %cst_10 : f32 to vector<1x256xf32>
    %22 = arith.addf %18, %21 : vector<1x256xf32>
    %23 = math.rsqrt %22 : vector<1x256xf32>
    %24 = vector.broadcast %23 : vector<1x256xf32> to vector<8x256xf32>
    %25 = arith.mulf %20, %24 : vector<8x256xf32>
    %c0_11 = arith.constant 0 : index
    %c0_12 = arith.constant 0 : index
    %26 = vector.load %arg3[%c0_11, %c0_12] : memref<1x256xf32, #tpu.memory_space<vmem>>, vector<1x256xf32>
    %27 = vector.broadcast %26 : vector<1x256xf32> to vector<8x256xf32>
    %28 = arith.mulf %25, %27 : vector<8x256xf32>
    %c0_13 = arith.constant 0 : index
    %c0_14 = arith.constant 0 : index
    %29 = vector.load %arg4[%c0_13, %c0_14] : memref<1x256xf32, #tpu.memory_space<vmem>>, vector<1x256xf32>
    %30 = vector.broadcast %29 : vector<1x256xf32> to vector<8x256xf32>
    %31 = arith.addf %28, %30 : vector<8x256xf32>
    %cst_15 = arith.constant 0.000000e+00 : f32
    %32 = vector.broadcast %cst_15 : f32 to vector<8x256xf32>
    %33 = arith.maximumf %31, %32 : vector<8x256xf32>
    %c0_16 = arith.constant 0 : index
    %c0_17 = arith.constant 0 : index
    %34 = vector.load %arg5[%c0_16, %c0_17] : memref<256x1024xf32, #tpu.memory_space<vmem>>, vector<256x1024xf32>
    %cst_18 = arith.constant dense<0.000000e+00> : vector<8x1024xf32>
    %35 = tpu.matmul %33, %34, %cst_18 {dimension_numbers = #tpu.dot_dimension_numbers<[1], [0], [0], [1], [0, 0, 1, 1], [], []>} : vector<8x256xf32>, vector<256x1024xf32>, vector<8x1024xf32> -> vector<8x1024xf32>
    %c0_19 = arith.constant 0 : index
    %c0_20 = arith.constant 0 : index
    %36 = vector.load %arg6[%c0_19, %c0_20] : memref<1x1024xf32, #tpu.memory_space<vmem>>, vector<1x1024xf32>
    %37 = vector.broadcast %36 : vector<1x1024xf32> to vector<8x1024xf32>
    %38 = arith.addf %35, %37 : vector<8x1024xf32>
    %39 = math.tanh %38 : vector<8x1024xf32>
    %c0_21 = arith.constant 0 : index
    %c0_22 = arith.constant 0 : index
    %40 = vector.load %arg7[%c0_21, %c0_22] : memref<8x1024xf32, #tpu.memory_space<vmem>>, vector<8x1024xf32>
    tpu.vector_store %arg7[%c0_21, %c0_22], %39 {strides = array<i32>} : memref<8x1024xf32, #tpu.memory_space<vmem>>, vector<8x1024xf32>,
    return
  }
}

</mosaic_0001>

<llo_original>
// kernel: mlp_generator_forward.1
$region0: #{mlp_generator_forward.1}
  #allocation0 [shape = 'u32[]', space=smem, size = 0x4, offset = 0x4, fixed_abs, tag = 'smem constant byte address 0x4 - core index']
  #allocation1 [shape = 'u32[72,128]{1,0:T(1,128)}', space=vmem, size = 0x9000, scoped, tag = 'internal scratch']
  %s0 = inlined_call_operand.hbm [shape: f32[8,64], index: 0, kind: input, shape index: {}]
  %s1 = inlined_call_operand.hbm [shape: f32[64,256], index: 1, kind: input, shape index: {}]
  %s2 = inlined_call_operand.hbm [shape: f32[1,256], index: 2, kind: input, shape index: {}]
  %s3 = inlined_call_operand.vmem [shape: f32[1,256], index: 3, kind: input, shape index: {}]
  %s4 = inlined_call_operand.hbm [shape: f32[1,256], index: 4, kind: input, shape index: {}]
  %s5 = inlined_call_operand.hbm [shape: f32[256,1024], index: 5, kind: input, shape index: {}]
  %s6 = inlined_call_operand.hbm [shape: f32[1,1024], index: 6, kind: input, shape index: {}]
  %s7 = inlined_call_operand.vmem [shape: f32[8,1024], index: 7, kind: output, shape index: {}]
  %s8 = sld [smem:[#allocation0]]
  $region62: #{mlp_generator_forward.1} parent=0
    _
  %s10 = ssub.s32 1, %s8
  %s11 = scalar_select 0, %s10, %s8
  $region1: #{mlp_generator_forward.1} parent=0
    #allocation2 [shape = 'u8[4096]{0}', space=vmem, size = 0x1000, scoped, tag = 'input window, operand 0, single buffered']
    #allocation3 [shape = 's32[1]{0}', space=sflag, size = 0x4, scoped, tag = 'scoped memory for mlp_generator_forward.1']
    #allocation4 [shape = 'u8[65536]{0}', space=vmem, size = 0x10000, scoped, tag = 'input window, operand 1, single buffered']
    #allocation5 [shape = 's32[1]{0}', space=sflag, size = 0x4, scoped, tag = 'scoped memory for mlp_generator_forward.1']
    #allocation6 [shape = 'u8[1024]{0}', space=vmem, size = 0x400, scoped, tag = 'input window, operand 2, single buffered']
    #allocation7 [shape = 'u8[1024]{0}', space=vmem, size = 0x400, scoped, tag = 'input window, operand 4, single buffered']
    #allocation8 [shape = 's32[1]{0}', space=sflag, size = 0x4, scoped, tag = 'scoped memory for mlp_generator_forward.1']
    #allocation9 [shape = 'u8[1048576]{0}', space=vmem, size = 0x100000, scoped, tag = 'input window, operand 5, single buffered']
    #allocation10 [shape = 'u8[4096]{0}', space=vmem, size = 0x1000, scoped, tag = 'input window, operand 6, single buffered']
    #allocation11 [shape = 's32[1]{0}', space=sflag, size = 0x4, scoped, tag = 'scoped memory for mlp_generator_forward.1']
    %12 = vsyncpa [#allocation3], 0
    %13 = vsyncpa [#allocation5], 0
    %14 = vsyncpa [#allocation8], 0
    %15 = vsyncpa [#allocation11], 0
    // Predicated region
    $region2: #{mlp_generator_forward.1} parent=1 // pred_check
      _
    $region3: #{mlp_generator_forward.1} parent=1 // pred_check_branch
      %17 = sbr.rel (0) target = $region5
    $region4: #{mlp_generator_forward.1} parent=1 // pred_region
      %19 = vsyncadd [#allocation3], 0
      %s21 = sshll.u32 %s0, 4
      %s22 = int_to_ptr.hbm [resolvable:$true] %s21
      %s23 = sshll.u32 [#allocation2], 4
      %s24 = int_to_ptr.vmem [resolvable:$true] %s23
      %26 = dma.hbm_to_vmem [thread:$0]  %s22, 128, %s24, [#allocation3]
    $region5: #{mlp_generator_forward.1} parent=1 // pred_fallthru
      _
    // Predicated region
    $region6: #{mlp_generator_forward.1} parent=1 // pred_check
      _
    $region7: #{mlp_generator_forward.1} parent=1 // pred_check_branch
      %28 = sbr.rel (0) target = $region9
    $region8: #{mlp_generator_forward.1} parent=1 // pred_region
      %30 = vsyncadd [#allocation5], 0
      %s31 = sshll.u32 %s1, 4
      %s32 = int_to_ptr.hbm [resolvable:$true] %s31
      %s33 = sshll.u32 [#allocation4], 4
      %s34 = int_to_ptr.vmem [resolvable:$true] %s33
      %39 = dma.hbm_to_vmem [thread:$0]  %s32, 2048, %s34, [#allocation5], 256, 256, 16
    $region9: #{mlp_generator_forward.1} parent=1 // pred_fallthru
      _
    // Predicated region
    $region10: #{mlp_generator_forward.1} parent=1 // pred_check
      _
    $region11: #{mlp_generator_forward.1} parent=1 // pred_check_branch
      %41 = sbr.rel (0) target = $region13
    $region12: #{mlp_generator_forward.1} parent=1 // pred_region
      %43 = vsyncadd [#allocation5], 0
      %s45 = sshll.u32 %s2, 4
      %s46 = int_to_ptr.hbm [resolvable:$true] %s45
      %s47 = sshll.u32 [#allocation6], 4
      %s48 = int_to_ptr.vmem [resolvable:$true] %s47
      %50 = dma.hbm_to_vmem [thread:$0]  %s46, 32, %s48, [#allocation5]
    $region13: #{mlp_generator_forward.1} parent=1 // pred_fallthru
      _
    // Predicated region
    $region14: #{mlp_generator_forward.1} parent=1 // pred_check
      _
    $region15: #{mlp_generator_forward.1} parent=1 // pred_check_branch
      %52 = sbr.rel (0) target = $region17
    $region16: #{mlp_generator_forward.1} parent=1 // pred_region
      _
    $region17: #{mlp_generator_forward.1} parent=1 // pred_fallthru
      _
    // Predicated region
    $region18: #{mlp_generator_forward.1} parent=1 // pred_check
      _
    $region19: #{mlp_generator_forward.1} parent=1 // pred_check_branch
      %54 = sbr.rel (0) target = $region21
    $region20: #{mlp_generator_forward.1} parent=1 // pred_region
      %56 = vsyncadd [#allocation8], 0
      %s58 = sshll.u32 %s4, 4
      %s59 = int_to_ptr.hbm [resolvable:$true] %s58
      %s60 = sshll.u32 [#allocation7], 4
      %s61 = int_to_ptr.vmem [resolvable:$true] %s60
      %63 = dma.hbm_to_vmem [thread:$0]  %s59, 32, %s61, [#allocation8]
    $region21: #{mlp_generator_forward.1} parent=1 // pred_fallthru
      _
    // Predicated region
    $region22: #{mlp_generator_forward.1} parent=1 // pred_check
      _
    $region23: #{mlp_generator_forward.1} parent=1 // pred_check_branch
      %65 = sbr.rel (0) target = $region25
    $region24: #{mlp_generator_forward.1} parent=1 // pred_region
      %67 = vsyncadd [#allocation8], 0
      %s68 = sshll.u32 %s5, 4
      %s69 = int_to_ptr.hbm [resolvable:$true] %s68
      %s70 = sshll.u32 [#allocation9], 4
      %s71 = int_to_ptr.vmem [resolvable:$true] %s70
      %76 = dma.hbm_to_vmem [thread:$0]  %s69, 32768, %s71, [#allocation8], 1024, 1024, 64
    $region25: #{mlp_generator_forward.1} parent=1 // pred_fallthru
      _
    // Predicated region
    $region26: #{mlp_generator_forward.1} parent=1 // pred_check
      _
    $region27: #{mlp_generator_forward.1} parent=1 // pred_check_branch
      %78 = sbr.rel (0) target = $region29
    $region28: #{mlp_generator_forward.1} parent=1 // pred_region
      %80 = vsyncadd [#allocation11], 0
      %s82 = sshll.u32 %s6, 4
      %s83 = int_to_ptr.hbm [resolvable:$true] %s82
      %s84 = sshll.u32 [#allocation10], 4
      %s85 = int_to_ptr.vmem [resolvable:$true] %s84
      %87 = dma.hbm_to_vmem [thread:$0]  %s83, 128, %s85, [#allocation11]
    $region29: #{mlp_generator_forward.1} parent=1 // pred_fallthru
      _
    // Predicated region
    $region30: #{mlp_generator_forward.1} parent=1 // pred_check
      _
    $region31: #{mlp_generator_forward.1} parent=1 // pred_check_branch
      %89 = sbr.rel (0) target = $region33
    $region32: #{mlp_generator_forward.1} parent=1 // pred_region
      %91 = dma.done [#allocation3], 128
    $region33: #{mlp_generator_forward.1} parent=1 // pred_fallthru
      _
    // Predicated region
    $region34: #{mlp_generator_forward.1} parent=1 // pred_check
      _
    $region35: #{mlp_generator_forward.1} parent=1 // pred_check_branch
      %93 = sbr.rel (0) target = $region37
    $region36: #{mlp_generator_forward.1} parent=1 // pred_region
      %95 = dma.done [#allocation5], 2048
    $region37: #{mlp_generator_forward.1} parent=1 // pred_fallthru
      _
    // Predicated region
    $region38: #{mlp_generator_forward.1} parent=1 // pred_check
      _
    $region39: #{mlp_generator_forward.1} parent=1 // pred_check_branch
      %97 = sbr.rel (0) target = $region41
    $region40: #{mlp_generator_forward.1} parent=1 // pred_region
      %99 = dma.done [#allocation5], 32
    $region41: #{mlp_generator_forward.1} parent=1 // pred_fallthru
      _
    // Predicated region
    $region42: #{mlp_generator_forward.1} parent=1 // pred_check
      _
    $region43: #{mlp_generator_forward.1} parent=1 // pred_check_branch
      %101 = sbr.rel (0) target = $region45
    $region44: #{mlp_generator_forward.1} parent=1 // pred_region
      %103 = dma.done [#allocation8], 32
    $region45: #{mlp_generator_forward.1} parent=1 // pred_fallthru
      _
    // Predicated region
    $region46: #{mlp_generator_forward.1} parent=1 // pred_check
      _
    $region47: #{mlp_generator_forward.1} parent=1 // pred_check_branch
      %105 = sbr.rel (0) target = $region49
    $region48: #{mlp_generator_forward.1} parent=1 // pred_region
      %107 = dma.done [#allocation8], 32768
    $region49: #{mlp_generator_forward.1} parent=1 // pred_fallthru
      _
    // Predicated region
    $region50: #{mlp_generator_forward.1} parent=1 // pred_check
      _
    $region51: #{mlp_generator_forward.1} parent=1 // pred_check_branch
      %109 = sbr.rel (0) target = $region53
    $region52: #{mlp_generator_forward.1} parent=1 // pred_region
      %111 = dma.done [#allocation11], 128
    $region53: #{mlp_generator_forward.1} parent=1 // pred_fallthru
      _
    %v112 = vld [vmem:[#allocation2] sm:$0xff]
    %v113 = vld [vmem:[#allocation4] sm:$0xff]
    %v114 = vld [vmem:[#allocation4 + $0x8] sm:$0xff]
    %v115 = vld [vmem:[#allocation4 + $0x10] sm:$0xff]
    %v116 = vld [vmem:[#allocation4 + $0x18] sm:$0xff]
    %v117 = vld [vmem:[#allocation4 + $0x20] sm:$0xff]
    %v118 = vld [vmem:[#allocation4 + $0x28] sm:$0xff]
    %v119 = vld [vmem:[#allocation4 + $0x30] sm:$0xff]
    %v120 = vld [vmem:[#allocation4 + $0x38] sm:$0xff]
    %v121 = vld [vmem:[#allocation4 + $0x40] sm:$0xff]
    %v122 = vld [vmem:[#allocation4 + $0x48] sm:$0xff]
    %v123 = vld [vmem:[#allocation4 + $0x50] sm:$0xff]
    %v124 = vld [vmem:[#allocation4 + $0x58] sm:$0xff]
    %v125 = vld [vmem:[#allocation4 + $0x60] sm:$0xff]
    %v126 = vld [vmem:[#allocation4 + $0x68] sm:$0xff]
    %v127 = vld [vmem:[#allocation4 + $0x70] sm:$0xff]
    %v128 = vld [vmem:[#allocation4 + $0x78] sm:$0xff]
    %v129 = vld [vmem:[#allocation6] sm:$0x3]
    %v131 = vperm.slane %v129, 0
    %v132 = vperm.slane %v129, 1
    %vm135 = vcmask 523264
    %v137 = vsel %vm135, %v112, 0
    %139 = vmatpush.msra.mxu0 0.0
    %140 = vmatpush.msra.mxu0 0.0
    %141 = vmatpush.msra.mxu0 0.0
    %142 = vmatpush.msra.mxu0 0.0
    %143 = vmatpush.msra.mxu0 0.0
    %144 = vmatpush.msra.mxu0 0.0
    %145 = vmatpush.msra.mxu0 0.0
    %146 = vmatpush.msra.mxu0 0.0
    %147 = vmatpush.msra.mxu0 %v127
    %148 = vmatpush.msra.mxu0 %v125
    %149 = vmatpush.msra.mxu0 %v123
    %150 = vmatpush.msra.mxu0 %v121
    %151 = vmatpush.msra.mxu0 %v119
    %152 = vmatpush.msra.mxu0 %v117
    %153 = vmatpush.msra.mxu0 %v115
    %154 = vmatpush.msra.mxu0 %v113
    %155 = vmatmul.f32.gmra.mxu0 %v137
    %v156 = vpop.f32.mrf.mxu0
    %v157 = vadd.f32 %v131, %v156
    %158 = vdwg.mxu0
    %159 = vmatpush.msra.mxu0 0.0
    %160 = vmatpush.msra.mxu0 0.0
    %161 = vmatpush.msra.mxu0 0.0
    %162 = vmatpush.msra.mxu0 0.0
    %163 = vmatpush.msra.mxu0 0.0
    %164 = vmatpush.msra.mxu0 0.0
    %165 = vmatpush.msra.mxu0 0.0
    %166 = vmatpush.msra.mxu0 0.0
    %167 = vmatpush.msra.mxu0 %v128
    %168 = vmatpush.msra.mxu0 %v126
    %169 = vmatpush.msra.mxu0 %v124
    %170 = vmatpush.msra.mxu0 %v122
    %171 = vmatpush.msra.mxu0 %v120
    %172 = vmatpush.msra.mxu0 %v118
    %173 = vmatpush.msra.mxu0 %v116
    %174 = vmatpush.msra.mxu0 %v114
    %175 = vmatmul.f32.gmra.mxu0 %v137
    %v176 = vpop.f32.mrf.mxu0
    %v177 = vadd.f32 %v132, %v176
    %178 = vdwg.mxu0
    %v179 = vrot.slane %v157, 4
    %v180 = vadd.f32 %v157, %v179
    %v181 = vrot.slane %v180, 2
    %v182 = vadd.f32 %v180, %v181
    %v183 = vrot.slane %v182, 1
    %v184 = vadd.f32 %v182, %v183
    %v185 = vrot.slane %v177, 4
    %v186 = vadd.f32 %v177, %v185
    %v187 = vrot.slane %v186, 2
    %v188 = vadd.f32 %v186, %v187
    %v189 = vrot.slane %v188, 1
    %v190 = vadd.f32 %v188, %v189
    %v191 = vrcp.pop 8.0
    %v192 = vmul.f32 8.0, %v191
    %v193 = vsub.f32 1.0, %v192
    %v194 = vmul.f32 %v191, %v193
    %v195 = vadd.f32 %v191, %v194
    %vm196 = vweird.f32 %v191
    %v197 = vsel %vm196, %v191, %v195
    %v198 = vmul.f32 %v184, %v197
    %v199 = vmul.f32 %v190, %v197
    %v200 = vmul.f32 %v157, %v157
    %v201 = vmul.f32 %v177, %v177
    %v202 = vrot.slane %v200, 4
    %v203 = vadd.f32 %v200, %v202
    %v204 = vrot.slane %v203, 2
    %v205 = vadd.f32 %v203, %v204
    %v206 = vrot.slane %v205, 1
    %v207 = vadd.f32 %v205, %v206
    %v208 = vrot.slane %v201, 4
    %v209 = vadd.f32 %v201, %v208
    %v210 = vrot.slane %v209, 2
    %v211 = vadd.f32 %v209, %v210
    %v212 = vrot.slane %v211, 1
    %v213 = vadd.f32 %v211, %v212
    %v214 = vmul.f32 %v207, %v197
    %v215 = vmul.f32 %v213, %v197
    %v216 = vmul.f32 %v198, %v198
    %v217 = vmul.f32 %v199, %v199
    %v218 = vsub.f32 %v214, %v216
    %v219 = vsub.f32 %v215, %v217
    %v220 = vmax.f32 %v218, 0.0
    %v221 = vmax.f32 %v219, 0.0
    %v222 = vsub.f32 %v157, %v198
    %v223 = vsub.f32 %v177, %v199
    %v224 = vadd.f32 %v220, 1e-05
    %v225 = vadd.f32 %v221, 1e-05
    %v226 = vrsqrt.pop %v224
    %v227 = vmul.f32 %v226, %v224
    %v228 = vmul.f32 %v227, %v226
    %v229 = vmul.f32 0.5, %v228
    %v230 = vsub.f32 1.5, %v229
    %v231 = vmul.f32 %v226, %v230
    %vm232 = vweird.f32 %v224
    %vm233 = vweird.f32 %v226
    %vm234 = vmor %vm232, %vm233
    %v235 = vsel %vm234, %v226, %v231
    %v236 = vrsqrt.pop %v225
    %v237 = vmul.f32 %v236, %v225
    %v238 = vmul.f32 %v237, %v236
    %v239 = vmul.f32 0.5, %v238
    %v240 = vsub.f32 1.5, %v239
    %v241 = vmul.f32 %v236, %v240
    %vm242 = vweird.f32 %v225
    %vm243 = vweird.f32 %v236
    %vm244 = vmor %vm242, %vm243
    %v245 = vsel %vm244, %v236, %v241
    %v246 = vmul.f32 %v222, %v235
    %v247 = vmul.f32 %v223, %v245
    %v248 = vld [vmem:[%s3] sm:$0x3]
    %v250 = vperm.slane %v248, 0
    %v251 = vperm.slane %v248, 1
    %v254 = vmul.f32 %v246, %v250
    %v255 = vmul.f32 %v247, %v251
    %v256 = vld [vmem:[#allocation7] sm:$0x3]
    %v258 = vperm.slane %v256, 0
    %v259 = vperm.slane %v256, 1
    %v262 = vadd.f32 %v254, %v258
    %v263 = vadd.f32 %v255, %v259
    %v264 = vmax.f32 %v262, 0.0
    %v265 = vmax.f32 %v263, 0.0
    %v266 = vld [vmem:[#allocation9] sm:$0xff]
    %v267 = vld [vmem:[#allocation9 + $0x8] sm:$0xff]
    %v268 = vld [vmem:[#allocation9 + $0x10] sm:$0xff]
    %v269 = vld [vmem:[#allocation9 + $0x18] sm:$0xff]
    %v270 = vld [vmem:[#allocation9 + $0x20] sm:$0xff]
    %v271 = vld [vmem:[#allocation9 + $0x28] sm:$0xff]
    %v272 = vld [vmem:[#allocation9 + $0x30] sm:$0xff]
    %v273 = vld [vmem:[#allocation9 + $0x38] sm:$0xff]
    %v274 = vld [vmem:[#allocation9 + $0x40] sm:$0xff]
    %v275 = vld [vmem:[#allocation9 + $0x48] sm:$0xff]
    %v276 = vld [vmem:[#allocation9 + $0x50] sm:$0xff]
    %v277 = vld [vmem:[#allocation9 + $0x58] sm:$0xff]
    %v278 = vld [vmem:[#allocation9 + $0x60] sm:$0xff]
    %v279 = vld [vmem:[#allocation9 + $0x68] sm:$0xff]
    %v280 = vld [vmem:[#allocation9 + $0x70] sm:$0xff]
    %v281 = vld [vmem:[#allocation9 + $0x78] sm:$0xff]
    %v282 = vld [vmem:[#allocation9 + $0x80] sm:$0xff]
    %v283 = vld [vmem:[#allocation9 + $0x88] sm:$0xff]
    %v284 = vld [vmem:[#allocation9 + $0x90] sm:$0xff]
    %v285 = vld [vmem:[#allocation9 + $0x98] sm:$0xff]
    %v286 = vld [vmem:[#allocation9 + $0xa0] sm:$0xff]
    %v287 = vld [vmem:[#allocation9 + $0xa8] sm:$0xff]
    %v288 = vld [vmem:[#allocation9 + $0xb0] sm:$0xff]
    %v289 = vld [vmem:[#allocation9 + $0xb8] sm:$0xff]
    %v290 = vld [vmem:[#allocation9 + $0xc0] sm:$0xff]
    %v291 = vld [vmem:[#allocation9 + $0xc8] sm:$0xff]
    %v292 = vld [vmem:[#allocation9 + $0xd0] sm:$0xff]
    %v293 = vld [vmem:[#allocation9 + $0xd8] sm:$0xff]
    %v294 = vld [vmem:[#allocation9 + $0xe0] sm:$0xff]
    %v295 = vld [vmem:[#allocation9 + $0xe8] sm:$0xff]
    %v296 = vld [vmem:[#allocation9 + $0xf0] sm:$0xff]
    %v297 = vld [vmem:[#allocation9 + $0xf8] sm:$0xff]
    %v298 = vld [vmem:[#allocation9 + $0x100] sm:$0xff]
    %v299 = vld [vmem:[#allocation9 + $0x108] sm:$0xff]
    %v300 = vld [vmem:[#allocation9 + $0x110] sm:$0xff]
    %v301 = vld [vmem:[#allocation9 + $0x118] sm:$0xff]
    %v302 = vld [vmem:[#allocation9 + $0x120] sm:$0xff]
    %v303 = vld [vmem:[#allocation9 + $0x128] sm:$0xff]
    %v304 = vld [vmem:[#allocation9 + $0x130] sm:$0xff]
    %v305 = vld [vmem:[#allocation9 + $0x138] sm:$0xff]
    %v306 = vld [vmem:[#allocation9 + $0x140] sm:$0xff]
    %v307 = vld [vmem:[#allocation9 + $0x148] sm:$0xff]
    %v308 = vld [vmem:[#allocation9 + $0x150] sm:$0xff]
    %v309 = vld [vmem:[#allocation9 + $0x158] sm:$0xff]
    %v310 = vld [vmem:[#allocation9 + $0x160] sm:$0xff]
    %v311 = vld [vmem:[#allocation9 + $0x168] sm:$0xff]
    %v312 = vld [vmem:[#allocation9 + $0x170] sm:$0xff]
    %v313 = vld [vmem:[#allocation9 + $0x178] sm:$0xff]
    %v314 = vld [vmem:[#allocation9 + $0x180] sm:$0xff]
    %v315 = vld [vmem:[#allocation9 + $0x188] sm:$0xff]
    %v316 = vld [vmem:[#allocation9 + $0x190] sm:$0xff]
    %v317 = vld [vmem:[#allocation9 + $0x198] sm:$0xff]
    %v318 = vld [vmem:[#allocation9 + $0x1a0] sm:$0xff]
    %v319 = vld [vmem:[#allocation9 + $0x1a8] sm:$0xff]
    %v320 = vld [vmem:[#allocation9 + $0x1b0] sm:$0xff]
    %v321 = vld [vmem:[#allocation9 + $0x1b8] sm:$0xff]
    %v322 = vld [vmem:[#allocation9 + $0x1c0] sm:$0xff]
    %v323 = vld [vmem:[#allocation9 + $0x1c8] sm:$0xff]
    %v324 = vld [vmem:[#allocation9 + $0x1d0] sm:$0xff]
    %v325 = vld [vmem:[#allocation9 + $0x1d8] sm:$0xff]
    %v326 = vld [vmem:[#allocation9 + $0x1e0] sm:$0xff]
    %v327 = vld [vmem:[#allocation9 + $0x1e8] sm:$0xff]
    %v328 = vld [vmem:[#allocation9 + $0x1f0] sm:$0xff]
    %v329 = vld [vmem:[#allocation9 + $0x1f8] sm:$0xff]
    %v330 = vld [vmem:[#allocation9 + $0x200] sm:$0xff]
    %v331 = vld [vmem:[#allocation9 + $0x208] sm:$0xff]
    %v332 = vld [vmem:[#allocation9 + $0x210] sm:$0xff]
    %v333 = vld [vmem:[#allocation9 + $0x218] sm:$0xff]
    %v334 = vld [vmem:[#allocation9 + $0x220] sm:$0xff]
    %v335 = vld [vmem:[#allocation9 + $0x228] sm:$0xff]
    %v336 = vld [vmem:[#allocation9 + $0x230] sm:$0xff]
    %v337 = vld [vmem:[#allocation9 + $0x238] sm:$0xff]
    %v338 = vld [vmem:[#allocation9 + $0x240] sm:$0xff]
    %v339 = vld [vmem:[#allocation9 + $0x248] sm:$0xff]
    %v340 = vld [vmem:[#allocation9 + $0x250] sm:$0xff]
    %v341 = vld [vmem:[#allocation9 + $0x258] sm:$0xff]
    %v342 = vld [vmem:[#allocation9 + $0x260] sm:$0xff]
    %v343 = vld [vmem:[#allocation9 + $0x268] sm:$0xff]
    %v344 = vld [vmem:[#allocation9 + $0x270] sm:$0xff]
    %v345 = vld [vmem:[#allocation9 + $0x278] sm:$0xff]
    %v346 = vld [vmem:[#allocation9 + $0x280] sm:$0xff]
    %v347 = vld [vmem:[#allocation9 + $0x288] sm:$0xff]
    %v348 = vld [vmem:[#allocation9 + $0x290] sm:$0xff]
    %v349 = vld [vmem:[#allocation9 + $0x298] sm:$0xff]
    %v350 = vld [vmem:[#allocation9 + $0x2a0] sm:$0xff]
    %v351 = vld [vmem:[#allocation9 + $0x2a8] sm:$0xff]
    %v352 = vld [vmem:[#allocation9 + $0x2b0] sm:$0xff]
    %v353 = vld [vmem:[#allocation9 + $0x2b8] sm:$0xff]
    %v354 = vld [vmem:[#allocation9 + $0x2c0] sm:$0xff]
    %v355 = vld [vmem:[#allocation9 + $0x2c8] sm:$0xff]
    %v356 = vld [vmem:[#allocation9 + $0x2d0] sm:$0xff]
    %v357 = vld [vmem:[#allocation9 + $0x2d8] sm:$0xff]
    %v358 = vld [vmem:[#allocation9 + $0x2e0] sm:$0xff]
    %v359 = vld [vmem:[#allocation9 + $0x2e8] sm:$0xff]
    %v360 = vld [vmem:[#allocation9 + $0x2f0] sm:$0xff]
    %v361 = vld [vmem:[#allocation9 + $0x2f8] sm:$0xff]
    %v362 = vld [vmem:[#allocation9 + $0x300] sm:$0xff]
    %v363 = vld [vmem:[#allocation9 + $0x308] sm:$0xff]
    %v364 = vld [vmem:[#allocation9 + $0x310] sm:$0xff]
    %v365 = vld [vmem:[#allocation9 + $0x318] sm:$0xff]
    %v366 = vld [vmem:[#allocation9 + $0x320] sm:$0xff]
    %v367 = vld [vmem:[#allocation9 + $0x328] sm:$0xff]
    %v368 = vld [vmem:[#allocation9 + $0x330] sm:$0xff]
    %v369 = vld [vmem:[#allocation9 + $0x338] sm:$0xff]
    %v370 = vld [vmem:[#allocation9 + $0x340] sm:$0xff]
    %v371 = vld [vmem:[#allocation9 + $0x348] sm:$0xff]
    %v372 = vld [vmem:[#allocation9 + $0x350] sm:$0xff]
    %v373 = vld [vmem:[#allocation9 + $0x358] sm:$0xff]
    %v374 = vld [vmem:[#allocation9 + $0x360] sm:$0xff]
    %v375 = vld [vmem:[#allocation9 + $0x368] sm:$0xff]
    %v376 = vld [vmem:[#allocation9 + $0x370] sm:$0xff]
    %v377 = vld [vmem:[#allocation9 + $0x378] sm:$0xff]
    %v378 = vld [vmem:[#allocation9 + $0x380] sm:$0xff]
    %v379 = vld [vmem:[#allocation9 + $0x388] sm:$0xff]
    %v380 = vld [vmem:[#allocation9 + $0x390] sm:$0xff]
    %v381 = vld [vmem:[#allocation9 + $0x398] sm:$0xff]
    %v382 = vld [vmem:[#allocation9 + $0x3a0] sm:$0xff]
    %v383 = vld [vmem:[#allocation9 + $0x3a8] sm:$0xff]
    %v384 = vld [vmem:[#allocation9 + $0x3b0] sm:$0xff]
    %v385 = vld [vmem:[#allocation9 + $0x3b8] sm:$0xff]
    %v386 = vld [vmem:[#allocation9 + $0x3c0] sm:$0xff]
    %v387 = vld [vmem:[#allocation9 + $0x3c8] sm:$0xff]
    %v388 = vld [vmem:[#allocation9 + $0x3d0] sm:$0xff]
    %v389 = vld [vmem:[#allocation9 + $0x3d8] sm:$0xff]
    %v390 = vld [vmem:[#allocation9 + $0x3e0] sm:$0xff]
    %v391 = vld [vmem:[#allocation9 + $0x3e8] sm:$0xff]
    %v392 = vld [vmem:[#allocation9 + $0x3f0] sm:$0xff]
    %v393 = vld [vmem:[#allocation9 + $0x3f8] sm:$0xff]
    %v394 = vld [vmem:[#allocation9 + $0x400] sm:$0xff]
    %v395 = vld [vmem:[#allocation9 + $0x408] sm:$0xff]
    %v396 = vld [vmem:[#allocation9 + $0x410] sm:$0xff]
    %v397 = vld [vmem:[#allocation9 + $0x418] sm:$0xff]
    %v398 = vld [vmem:[#allocation9 + $0x420] sm:$0xff]
    %v399 = vld [vmem:[#allocation9 + $0x428] sm:$0xff]
    %v400 = vld [vmem:[#allocation9 + $0x430] sm:$0xff]
    %v401 = vld [vmem:[#allocation9 + $0x438] sm:$0xff]
    %v402 = vld [vmem:[#allocation9 + $0x440] sm:$0xff]
    %v403 = vld [vmem:[#allocation9 + $0x448] sm:$0xff]
    %v404 = vld [vmem:[#allocation9 + $0x450] sm:$0xff]
    %v405 = vld [vmem:[#allocation9 + $0x458] sm:$0xff]
    %v406 = vld [vmem:[#allocation9 + $0x460] sm:$0xff]
    %v407 = vld [vmem:[#allocation9 + $0x468] sm:$0xff]
    %v408 = vld [vmem:[#allocation9 + $0x470] sm:$0xff]
    %v409 = vld [vmem:[#allocation9 + $0x478] sm:$0xff]
    %v410 = vld [vmem:[#allocation9 + $0x480] sm:$0xff]
    %v411 = vld [vmem:[#allocation9 + $0x488] sm:$0xff]
    %v412 = vld [vmem:[#allocation9 + $0x490] sm:$0xff]
    %v413 = vld [vmem:[#allocation9 + $0x498] sm:$0xff]
    %v414 = vld [vmem:[#allocation9 + $0x4a0] sm:$0xff]
    %v415 = vld [vmem:[#allocation9 + $0x4a8] sm:$0xff]
    %v416 = vld [vmem:[#allocation9 + $0x4b0] sm:$0xff]
    %v417 = vld [vmem:[#allocation9 + $0x4b8] sm:$0xff]
    %v418 = vld [vmem:[#allocation9 + $0x4c0] sm:$0xff]
    %v419 = vld [vmem:[#allocation9 + $0x4c8] sm:$0xff]
    %v420 = vld [vmem:[#allocation9 + $0x4d0] sm:$0xff]
    %v421 = vld [vmem:[#allocation9 + $0x4d8] sm:$0xff]
    %v422 = vld [vmem:[#allocation9 + $0x4e0] sm:$0xff]
    %v423 = vld [vmem:[#allocation9 + $0x4e8] sm:$0xff]
    %v424 = vld [vmem:[#allocation9 + $0x4f0] sm:$0xff]
    %v425 = vld [vmem:[#allocation9 + $0x4f8] sm:$0xff]
    %v426 = vld [vmem:[#allocation9 + $0x500] sm:$0xff]
    %v427 = vld [vmem:[#allocation9 + $0x508] sm:$0xff]
    %v428 = vld [vmem:[#allocation9 + $0x510] sm:$0xff]
    %v429 = vld [vmem:[#allocation9 + $0x518] sm:$0xff]
    %v430 = vld [vmem:[#allocation9 + $0x520] sm:$0xff]
    %v431 = vld [vmem:[#allocation9 + $0x528] sm:$0xff]
    %v432 = vld [vmem:[#allocation9 + $0x530] sm:$0xff]
    %v433 = vld [vmem:[#allocation9 + $0x538] sm:$0xff]
    %v434 = vld [vmem:[#allocation9 + $0x540] sm:$0xff]
    %v435 = vld [vmem:[#allocation9 + $0x548] sm:$0xff]
    %v436 = vld [vmem:[#allocation9 + $0x550] sm:$0xff]
    %v437 = vld [vmem:[#allocation9 + $0x558] sm:$0xff]
    %v438 = vld [vmem:[#allocation9 + $0x560] sm:$0xff]
    %v439 = vld [vmem:[#allocation9 + $0x568] sm:$0xff]
    %v440 = vld [vmem:[#allocation9 + $0x570] sm:$0xff]
    %v441 = vld [vmem:[#allocation9 + $0x578] sm:$0xff]
    %v442 = vld [vmem:[#allocation9 + $0x580] sm:$0xff]
    %v443 = vld [vmem:[#allocation9 + $0x588] sm:$0xff]
    %v444 = vld [vmem:[#allocation9 + $0x590] sm:$0xff]
    %v445 = vld [vmem:[#allocation9 + $0x598] sm:$0xff]
    %v446 = vld [vmem:[#allocation9 + $0x5a0] sm:$0xff]
    %v447 = vld [vmem:[#allocation9 + $0x5a8] sm:$0xff]
    %v448 = vld [vmem:[#allocation9 + $0x5b0] sm:$0xff]
    %v449 = vld [vmem:[#allocation9 + $0x5b8] sm:$0xff]
    %v450 = vld [vmem:[#allocation9 + $0x5c0] sm:$0xff]
    %v451 = vld [vmem:[#allocation9 + $0x5c8] sm:$0xff]
    %v452 = vld [vmem:[#allocation9 + $0x5d0] sm:$0xff]
    %v453 = vld [vmem:[#allocation9 + $0x5d8] sm:$0xff]
    %v454 = vld [vmem:[#allocation9 + $0x5e0] sm:$0xff]
    %v455 = vld [vmem:[#allocation9 + $0x5e8] sm:$0xff]
    %v456 = vld [vmem:[#allocation9 + $0x5f0] sm:$0xff]
    %v457 = vld [vmem:[#allocation9 + $0x5f8] sm:$0xff]
    %v458 = vld [vmem:[#allocation9 + $0x600] sm:$0xff]
    %v459 = vld [vmem:[#allocation9 + $0x608] sm:$0xff]
    %v460 = vld [vmem:[#allocation9 + $0x610] sm:$0xff]
    %v461 = vld [vmem:[#allocation9 + $0x618] sm:$0xff]
    %v462 = vld [vmem:[#allocation9 + $0x620] sm:$0xff]
    %v463 = vld [vmem:[#allocation9 + $0x628] sm:$0xff]
    %v464 = vld [vmem:[#allocation9 + $0x630] sm:$0xff]
    %v465 = vld [vmem:[#allocation9 + $0x638] sm:$0xff]
    %v466 = vld [vmem:[#allocation9 + $0x640] sm:$0xff]
    %v467 = vld [vmem:[#allocation9 + $0x648] sm:$0xff]
    %v468 = vld [vmem:[#allocation9 + $0x650] sm:$0xff]
    %v469 = vld [vmem:[#allocation9 + $0x658] sm:$0xff]
    %v470 = vld [vmem:[#allocation9 + $0x660] sm:$0xff]
    %v471 = vld [vmem:[#allocation9 + $0x668] sm:$0xff]
    %v472 = vld [vmem:[#allocation9 + $0x670] sm:$0xff]
    %v473 = vld [vmem:[#allocation9 + $0x678] sm:$0xff]
    %v474 = vld [vmem:[#allocation9 + $0x680] sm:$0xff]
    %v475 = vld [vmem:[#allocation9 + $0x688] sm:$0xff]
    %v476 = vld [vmem:[#allocation9 + $0x690] sm:$0xff]
    %v477 = vld [vmem:[#allocation9 + $0x698] sm:$0xff]
    %v478 = vld [vmem:[#allocation9 + $0x6a0] sm:$0xff]
    %v479 = vld [vmem:[#allocation9 + $0x6a8] sm:$0xff]
    %v480 = vld [vmem:[#allocation9 + $0x6b0] sm:$0xff]
    %v481 = vld [vmem:[#allocation9 + $0x6b8] sm:$0xff]
    %v482 = vld [vmem:[#allocation9 + $0x6c0] sm:$0xff]
    %v483 = vld [vmem:[#allocation9 + $0x6c8] sm:$0xff]
    %v484 = vld [vmem:[#allocation9 + $0x6d0] sm:$0xff]
    %v485 = vld [vmem:[#allocation9 + $0x6d8] sm:$0xff]
    %v486 = vld [vmem:[#allocation9 + $0x6e0] sm:$0xff]
    %v487 = vld [vmem:[#allocation9 + $0x6e8] sm:$0xff]
    %v488 = vld [vmem:[#allocation9 + $0x6f0] sm:$0xff]
    %v489 = vld [vmem:[#allocation9 + $0x6f8] sm:$0xff]
    %v490 = vld [vmem:[#allocation9 + $0x700] sm:$0xff]
    %v491 = vld [vmem:[#allocation9 + $0x708] sm:$0xff]
    %v492 = vld [vmem:[#allocation9 + $0x710] sm:$0xff]
    %v493 = vld [vmem:[#allocation9 + $0x718] sm:$0xff]
    %v494 = vld [vmem:[#allocation9 + $0x720] sm:$0xff]
    %v495 = vld [vmem:[#allocation9 + $0x728] sm:$0xff]
    %v496 = vld [vmem:[#allocation9 + $0x730] sm:$0xff]
    %v497 = vld [vmem:[#allocation9 + $0x738] sm:$0xff]
    %v498 = vld [vmem:[#allocation9 + $0x740] sm:$0xff]
    %v499 = vld [vmem:[#allocation9 + $0x748] sm:$0xff]
    %v500 = vld [vmem:[#allocation9 + $0x750] sm:$0xff]
    %v501 = vld [vmem:[#allocation9 + $0x758] sm:$0xff]
    %v502 = vld [vmem:[#allocation9 + $0x760] sm:$0xff]
    %v503 = vld [vmem:[#allocation9 + $0x768] sm:$0xff]
    %v504 = vld [vmem:[#allocation9 + $0x770] sm:$0xff]
    %v505 = vld [vmem:[#allocation9 + $0x778] sm:$0xff]
    %v506 = vld [vmem:[#allocation9 + $0x780] sm:$0xff]
    %v507 = vld [vmem:[#allocation9 + $0x788] sm:$0xff]
    %v508 = vld [vmem:[#allocation9 + $0x790] sm:$0xff]
    %v509 = vld [vmem:[#allocation9 + $0x798] sm:$0xff]
    %v510 = vld [vmem:[#allocation9 + $0x7a0] sm:$0xff]
    %v511 = vld [vmem:[#allocation9 + $0x7a8] sm:$0xff]
    %v512 = vld [vmem:[#allocation9 + $0x7b0] sm:$0xff]
    %v513 = vld [vmem:[#allocation9 + $0x7b8] sm:$0xff]
    %v514 = vld [vmem:[#allocation9 + $0x7c0] sm:$0xff]
    %v515 = vld [vmem:[#allocation9 + $0x7c8] sm:$0xff]
    %v516 = vld [vmem:[#allocation9 + $0x7d0] sm:$0xff]
    %v517 = vld [vmem:[#allocation9 + $0x7d8] sm:$0xff]
    %v518 = vld [vmem:[#allocation9 + $0x7e0] sm:$0xff]
    %v519 = vld [vmem:[#allocation9 + $0x7e8] sm:$0xff]
    %v520 = vld [vmem:[#allocation9 + $0x7f0] sm:$0xff]
    %v521 = vld [vmem:[#allocation9 + $0x7f8] sm:$0xff]
    %v522 = vld [vmem:[#allocation10] sm:$0xff]
    %v524 = vperm.slane %v522, 0
    %v525 = vperm.slane %v522, 1
    %v526 = vperm.slane %v522, 2
    %v527 = vperm.slane %v522, 3
    %v528 = vperm.slane %v522, 4
    %v529 = vperm.slane %v522, 5
    %v530 = vperm.slane %v522, 6
    %v531 = vperm.slane %v522, 7
    %540 = vmatpush.msra.mxu0 %v386
    %541 = vmatpush.msra.mxu0 %v378
    %542 = vmatpush.msra.mxu0 %v370
    %543 = vmatpush.msra.mxu0 %v362
    %544 = vmatpush.msra.mxu0 %v354
    %545 = vmatpush.msra.mxu0 %v346
    %546 = vmatpush.msra.mxu0 %v338
    %547 = vmatpush.msra.mxu0 %v330
    %548 = vmatpush.msra.mxu0 %v322
    %549 = vmatpush.msra.mxu0 %v314
    %550 = vmatpush.msra.mxu0 %v306
    %551 = vmatpush.msra.mxu0 %v298
    %552 = vmatpush.msra.mxu0 %v290
    %553 = vmatpush.msra.mxu0 %v282
    %554 = vmatpush.msra.mxu0 %v274
    %555 = vmatpush.msra.mxu0 %v266
    %556 = vmatmul.f32.gmra.mxu0 %v264
    %v557 = vpop.f32.mrf.mxu0
    %v558 = vadd.f32 %v524, %v557
    %559 = vdwg.mxu0
    %560 = vmatpush.msra.mxu0 %v514
    %561 = vmatpush.msra.mxu0 %v506
    %562 = vmatpush.msra.mxu0 %v498
    %563 = vmatpush.msra.mxu0 %v490
    %564 = vmatpush.msra.mxu0 %v482
    %565 = vmatpush.msra.mxu0 %v474
    %566 = vmatpush.msra.mxu0 %v466
    %567 = vmatpush.msra.mxu0 %v458
    %568 = vmatpush.msra.mxu0 %v450
    %569 = vmatpush.msra.mxu0 %v442
    %570 = vmatpush.msra.mxu0 %v434
    %571 = vmatpush.msra.mxu0 %v426
    %572 = vmatpush.msra.mxu0 %v418
    %573 = vmatpush.msra.mxu0 %v410
    %574 = vmatpush.msra.mxu0 %v402
    %575 = vmatpush.msra.mxu0 %v394
    %576 = vmatmul.f32.gmra.mxu0 %v265
    %v577 = vpop.f32.mrf.mxu0
    %v578 = vadd.f32 %v558, %v577
    %579 = vdwg.mxu0
    %580 = vmatpush.msra.mxu0 %v387
    %581 = vmatpush.msra.mxu0 %v379
    %582 = vmatpush.msra.mxu0 %v371
    %583 = vmatpush.msra.mxu0 %v363
    %584 = vmatpush.msra.mxu0 %v355
    %585 = vmatpush.msra.mxu0 %v347
    %586 = vmatpush.msra.mxu0 %v339
    %587 = vmatpush.msra.mxu0 %v331
    %588 = vmatpush.msra.mxu0 %v323
    %589 = vmatpush.msra.mxu0 %v315
    %590 = vmatpush.msra.mxu0 %v307
    %591 = vmatpush.msra.mxu0 %v299
    %592 = vmatpush.msra.mxu0 %v291
    %593 = vmatpush.msra.mxu0 %v283
    %594 = vmatpush.msra.mxu0 %v275
    %595 = vmatpush.msra.mxu0 %v267
    %596 = vmatmul.f32.gmra.mxu0 %v264
    %v597 = vpop.f32.mrf.mxu0
    %v598 = vadd.f32 %v525, %v597
    %599 = vdwg.mxu0
    %600 = vmatpush.msra.mxu0 %v515
    %601 = vmatpush.msra.mxu0 %v507
    %602 = vmatpush.msra.mxu0 %v499
    %603 = vmatpush.msra.mxu0 %v491
    %604 = vmatpush.msra.mxu0 %v483
    %605 = vmatpush.msra.mxu0 %v475
    %606 = vmatpush.msra.mxu0 %v467
    %607 = vmatpush.msra.mxu0 %v459
    %608 = vmatpush.msra.mxu0 %v451
    %609 = vmatpush.msra.mxu0 %v443
    %610 = vmatpush.msra.mxu0 %v435
    %611 = vmatpush.msra.mxu0 %v427
    %612 = vmatpush.msra.mxu0 %v419
    %613 = vmatpush.msra.mxu0 %v411
    %614 = vmatpush.msra.mxu0 %v403
    %615 = vmatpush.msra.mxu0 %v395
    %616 = vmatmul.f32.gmra.mxu0 %v265
    %v617 = vpop.f32.mrf.mxu0
    %v618 = vadd.f32 %v598, %v617
    %619 = vdwg.mxu0
    %620 = vmatpush.msra.mxu0 %v388
    %621 = vmatpush.msra.mxu0 %v380
    %622 = vmatpush.msra.mxu0 %v372
    %623 = vmatpush.msra.mxu0 %v364
    %624 = vmatpush.msra.mxu0 %v356
    %625 = vmatpush.msra.mxu0 %v348
    %626 = vmatpush.msra.mxu0 %v340
    %627 = vmatpush.msra.mxu0 %v332
    %628 = vmatpush.msra.mxu0 %v324
    %629 = vmatpush.msra.mxu0 %v316
    %630 = vmatpush.msra.mxu0 %v308
    %631 = vmatpush.msra.mxu0 %v300
    %632 = vmatpush.msra.mxu0 %v292
    %633 = vmatpush.msra.mxu0 %v284
    %634 = vmatpush.msra.mxu0 %v276
    %635 = vmatpush.msra.mxu0 %v268
    %636 = vmatmul.f32.gmra.mxu0 %v264
    %v637 = vpop.f32.mrf.mxu0
    %v638 = vadd.f32 %v526, %v637
    %639 = vdwg.mxu0
    %640 = vmatpush.msra.mxu0 %v516
    %641 = vmatpush.msra.mxu0 %v508
    %642 = vmatpush.msra.mxu0 %v500
    %643 = vmatpush.msra.mxu0 %v492
    %644 = vmatpush.msra.mxu0 %v484
    %645 = vmatpush.msra.mxu0 %v476
    %646 = vmatpush.msra.mxu0 %v468
    %647 = vmatpush.msra.mxu0 %v460
    %648 = vmatpush.msra.mxu0 %v452
    %649 = vmatpush.msra.mxu0 %v444
    %650 = vmatpush.msra.mxu0 %v436
    %651 = vmatpush.msra.mxu0 %v428
    %652 = vmatpush.msra.mxu0 %v420
    %653 = vmatpush.msra.mxu0 %v412
    %654 = vmatpush.msra.mxu0 %v404
    %655 = vmatpush.msra.mxu0 %v396
    %656 = vmatmul.f32.gmra.mxu0 %v265
    %v657 = vpop.f32.mrf.mxu0
    %v658 = vadd.f32 %v638, %v657
    %659 = vdwg.mxu0
    %660 = vmatpush.msra.mxu0 %v389
    %661 = vmatpush.msra.mxu0 %v381
    %662 = vmatpush.msra.mxu0 %v373
    %663 = vmatpush.msra.mxu0 %v365
    %664 = vmatpush.msra.mxu0 %v357
    %665 = vmatpush.msra.mxu0 %v349
    %666 = vmatpush.msra.mxu0 %v341
    %667 = vmatpush.msra.mxu0 %v333
    %668 = vmatpush.msra.mxu0 %v325
    %669 = vmatpush.msra.mxu0 %v317
    %670 = vmatpush.msra.mxu0 %v309
    %671 = vmatpush.msra.mxu0 %v301
    %672 = vmatpush.msra.mxu0 %v293
    %673 = vmatpush.msra.mxu0 %v285
    %674 = vmatpush.msra.mxu0 %v277
    %675 = vmatpush.msra.mxu0 %v269
    %676 = vmatmul.f32.gmra.mxu0 %v264
    %v677 = vpop.f32.mrf.mxu0
    %v678 = vadd.f32 %v527, %v677
    %679 = vdwg.mxu0
    %680 = vmatpush.msra.mxu0 %v517
    %681 = vmatpush.msra.mxu0 %v509
    %682 = vmatpush.msra.mxu0 %v501
    %683 = vmatpush.msra.mxu0 %v493
    %684 = vmatpush.msra.mxu0 %v485
    %685 = vmatpush.msra.mxu0 %v477
    %686 = vmatpush.msra.mxu0 %v469
    %687 = vmatpush.msra.mxu0 %v461
    %688 = vmatpush.msra.mxu0 %v453
    %689 = vmatpush.msra.mxu0 %v445
    %690 = vmatpush.msra.mxu0 %v437
    %691 = vmatpush.msra.mxu0 %v429
    %692 = vmatpush.msra.mxu0 %v421
    %693 = vmatpush.msra.mxu0 %v413
    %694 = vmatpush.msra.mxu0 %v405
    %695 = vmatpush.msra.mxu0 %v397
    %696 = vmatmul.f32.gmra.mxu0 %v265
    %v697 = vpop.f32.mrf.mxu0
    %v698 = vadd.f32 %v678, %v697
    %699 = vdwg.mxu0
    %700 = vmatpush.msra.mxu0 %v390
    %701 = vmatpush.msra.mxu0 %v382
    %702 = vmatpush.msra.mxu0 %v374
    %703 = vmatpush.msra.mxu0 %v366
    %704 = vmatpush.msra.mxu0 %v358
    %705 = vmatpush.msra.mxu0 %v350
    %706 = vmatpush.msra.mxu0 %v342
    %707 = vmatpush.msra.mxu0 %v334
    %708 = vmatpush.msra.mxu0 %v326
    %709 = vmatpush.msra.mxu0 %v318
    %710 = vmatpush.msra.mxu0 %v310
    %711 = vmatpush.msra.mxu0 %v302
    %712 = vmatpush.msra.mxu0 %v294
    %713 = vmatpush.msra.mxu0 %v286
    %714 = vmatpush.msra.mxu0 %v278
    %715 = vmatpush.msra.mxu0 %v270
    %716 = vmatmul.f32.gmra.mxu0 %v264
    %v717 = vpop.f32.mrf.mxu0
    %v718 = vadd.f32 %v528, %v717
    %719 = vdwg.mxu0
    %720 = vmatpush.msra.mxu0 %v518
    %721 = vmatpush.msra.mxu0 %v510
    %722 = vmatpush.msra.mxu0 %v502
    %723 = vmatpush.msra.mxu0 %v494
    %724 = vmatpush.msra.mxu0 %v486
    %725 = vmatpush.msra.mxu0 %v478
    %726 = vmatpush.msra.mxu0 %v470
    %727 = vmatpush.msra.mxu0 %v462
    %728 = vmatpush.msra.mxu0 %v454
    %729 = vmatpush.msra.mxu0 %v446
    %730 = vmatpush.msra.mxu0 %v438
    %731 = vmatpush.msra.mxu0 %v430
    %732 = vmatpush.msra.mxu0 %v422
    %733 = vmatpush.msra.mxu0 %v414
    %734 = vmatpush.msra.mxu0 %v406
    %735 = vmatpush.msra.mxu0 %v398
    %736 = vmatmul.f32.gmra.mxu0 %v265
    %v737 = vpop.f32.mrf.mxu0
    %v738 = vadd.f32 %v718, %v737
    %739 = vdwg.mxu0
    %740 = vmatpush.msra.mxu0 %v391
    %741 = vmatpush.msra.mxu0 %v383
    %742 = vmatpush.msra.mxu0 %v375
    %743 = vmatpush.msra.mxu0 %v367
    %744 = vmatpush.msra.mxu0 %v359
    %745 = vmatpush.msra.mxu0 %v351
    %746 = vmatpush.msra.mxu0 %v343
    %747 = vmatpush.msra.mxu0 %v335
    %748 = vmatpush.msra.mxu0 %v327
    %749 = vmatpush.msra.mxu0 %v319
    %750 = vmatpush.msra.mxu0 %v311
    %751 = vmatpush.msra.mxu0 %v303
    %752 = vmatpush.msra.mxu0 %v295
    %753 = vmatpush.msra.mxu0 %v287
    %754 = vmatpush.msra.mxu0 %v279
    %755 = vmatpush.msra.mxu0 %v271
    %756 = vmatmul.f32.gmra.mxu0 %v264
    %v757 = vpop.f32.mrf.mxu0
    %v758 = vadd.f32 %v529, %v757
    %759 = vdwg.mxu0
    %760 = vmatpush.msra.mxu0 %v519
    %761 = vmatpush.msra.mxu0 %v511
    %762 = vmatpush.msra.mxu0 %v503
    %763 = vmatpush.msra.mxu0 %v495
    %764 = vmatpush.msra.mxu0 %v487
    %765 = vmatpush.msra.mxu0 %v479
    %766 = vmatpush.msra.mxu0 %v471
    %767 = vmatpush.msra.mxu0 %v463
    %768 = vmatpush.msra.mxu0 %v455
    %769 = vmatpush.msra.mxu0 %v447
    %770 = vmatpush.msra.mxu0 %v439
    %771 = vmatpush.msra.mxu0 %v431
    %772 = vmatpush.msra.mxu0 %v423
    %773 = vmatpush.msra.mxu0 %v415
    %774 = vmatpush.msra.mxu0 %v407
    %775 = vmatpush.msra.mxu0 %v399
    %776 = vmatmul.f32.gmra.mxu0 %v265
    %v777 = vpop.f32.mrf.mxu0
    %v778 = vadd.f32 %v758, %v777
    %779 = vdwg.mxu0
    %780 = vmatpush.msra.mxu0 %v392
    %781 = vmatpush.msra.mxu0 %v384
    %782 = vmatpush.msra.mxu0 %v376
    %783 = vmatpush.msra.mxu0 %v368
    %784 = vmatpush.msra.mxu0 %v360
    %785 = vmatpush.msra.mxu0 %v352
    %786 = vmatpush.msra.mxu0 %v344
    %787 = vmatpush.msra.mxu0 %v336
    %788 = vmatpush.msra.mxu0 %v328
    %789 = vmatpush.msra.mxu0 %v320
    %790 = vmatpush.msra.mxu0 %v312
    %791 = vmatpush.msra.mxu0 %v304
    %792 = vmatpush.msra.mxu0 %v296
    %793 = vmatpush.msra.mxu0 %v288
    %794 = vmatpush.msra.mxu0 %v280
    %795 = vmatpush.msra.mxu0 %v272
    %796 = vmatmul.f32.gmra.mxu0 %v264
    %v797 = vpop.f32.mrf.mxu0
    %v798 = vadd.f32 %v530, %v797
    %799 = vdwg.mxu0
    %800 = vmatpush.msra.mxu0 %v520
    %801 = vmatpush.msra.mxu0 %v512
    %802 = vmatpush.msra.mxu0 %v504
    %803 = vmatpush.msra.mxu0 %v496
    %804 = vmatpush.msra.mxu0 %v488
    %805 = vmatpush.msra.mxu0 %v480
    %806 = vmatpush.msra.mxu0 %v472
    %807 = vmatpush.msra.mxu0 %v464
    %808 = vmatpush.msra.mxu0 %v456
    %809 = vmatpush.msra.mxu0 %v448
    %810 = vmatpush.msra.mxu0 %v440
    %811 = vmatpush.msra.mxu0 %v432
    %812 = vmatpush.msra.mxu0 %v424
    %813 = vmatpush.msra.mxu0 %v416
    %814 = vmatpush.msra.mxu0 %v408
    %815 = vmatpush.msra.mxu0 %v400
    %816 = vmatmul.f32.gmra.mxu0 %v265
    %v817 = vpop.f32.mrf.mxu0
    %v818 = vadd.f32 %v798, %v817
    %819 = vdwg.mxu0
    %820 = vmatpush.msra.mxu0 %v393
    %821 = vmatpush.msra.mxu0 %v385
    %822 = vmatpush.msra.mxu0 %v377
    %823 = vmatpush.msra.mxu0 %v369
    %824 = vmatpush.msra.mxu0 %v361
    %825 = vmatpush.msra.mxu0 %v353
    %826 = vmatpush.msra.mxu0 %v345
    %827 = vmatpush.msra.mxu0 %v337
    %828 = vmatpush.msra.mxu0 %v329
    %829 = vmatpush.msra.mxu0 %v321
    %830 = vmatpush.msra.mxu0 %v313
    %831 = vmatpush.msra.mxu0 %v305
    %832 = vmatpush.msra.mxu0 %v297
    %833 = vmatpush.msra.mxu0 %v289
    %834 = vmatpush.msra.mxu0 %v281
    %835 = vmatpush.msra.mxu0 %v273
    %836 = vmatmul.f32.gmra.mxu0 %v264
    %v837 = vpop.f32.mrf.mxu0
    %v838 = vadd.f32 %v531, %v837
    %839 = vdwg.mxu0
    %840 = vmatpush.msra.mxu0 %v521
    %841 = vmatpush.msra.mxu0 %v513
    %842 = vmatpush.msra.mxu0 %v505
    %843 = vmatpush.msra.mxu0 %v497
    %844 = vmatpush.msra.mxu0 %v489
    %845 = vmatpush.msra.mxu0 %v481
    %846 = vmatpush.msra.mxu0 %v473
    %847 = vmatpush.msra.mxu0 %v465
    %848 = vmatpush.msra.mxu0 %v457
    %849 = vmatpush.msra.mxu0 %v449
    %850 = vmatpush.msra.mxu0 %v441
    %851 = vmatpush.msra.mxu0 %v433
    %852 = vmatpush.msra.mxu0 %v425
    %853 = vmatpush.msra.mxu0 %v417
    %854 = vmatpush.msra.mxu0 %v409
    %855 = vmatpush.msra.mxu0 %v401
    %856 = vmatmul.f32.gmra.mxu0 %v265
    %v857 = vpop.f32.mrf.mxu0
    %v858 = vadd.f32 %v838, %v857
    %859 = vdwg.mxu0
    %v860 = vtanh.pop %v578
    %v861 = vtanh.pop %v618
    %v862 = vtanh.pop %v658
    %v863 = vtanh.pop %v698
    %v864 = vtanh.pop %v738
    %v865 = vtanh.pop %v778
    %v866 = vtanh.pop %v818
    %v867 = vtanh.pop %v858
    %868 = vst [vmem:[%s7] sm:$0xff] %v860
    %869 = vst [vmem:[%s7 + $0x8] sm:$0xff] %v861
    %870 = vst [vmem:[%s7 + $0x10] sm:$0xff] %v862
    %871 = vst [vmem:[%s7 + $0x18] sm:$0xff] %v863
    %872 = vst [vmem:[%s7 + $0x20] sm:$0xff] %v864
    %873 = vst [vmem:[%s7 + $0x28] sm:$0xff] %v865
    %874 = vst [vmem:[%s7 + $0x30] sm:$0xff] %v866
    %875 = vst [vmem:[%s7 + $0x38] sm:$0xff] %v867
    // Predicated region
    $region54: #{mlp_generator_forward.1} parent=1 // pred_check
      _
    $region55: #{mlp_generator_forward.1} parent=1 // pred_check_branch
      %877 = sbr.rel (0) target = $region57
    $region56: #{mlp_generator_forward.1} parent=1 // pred_region
      _
    $region57: #{mlp_generator_forward.1} parent=1 // pred_fallthru
      _
    // Predicated region
    $region58: #{mlp_generator_forward.1} parent=1 // pred_check
      _
    $region59: #{mlp_generator_forward.1} parent=1 // pred_check_branch
      %879 = sbr.rel (0) target = $region61
    $region60: #{mlp_generator_forward.1} parent=1 // pred_region
      _
    $region61: #{mlp_generator_forward.1} parent=1 // pred_fallthru
      _
    %880 = vsyncpa [#allocation3], 1
    %881 = vsyncpa [#allocation5], 1
    %882 = vsyncpa [#allocation8], 1
    %883 = vsyncpa [#allocation11], 1

</llo_original>
